<compile_context>
chip_gen: v7x
topology: tpu7x:2x2x1
jax: 0.10.0
libtpu: 0.0.40
codegen_flags: <defaults>
</compile_context>

<pallas_src>
import jax
import jax.numpy as jnp
from jax.experimental import pallas as pl
from jax.experimental.pallas import tpu as pltpu

LANE = 128            # lane width; batch axis is padded/tiled in lane units
PARAM_LEN = 32        # packed parameter vector length (26 used, padded to 32)

# Offsets into the packed SMEM parameter vector (row-major weights, then bias).
_W1, _B1 = 0, 6       # Linear(2, 3): 6 weights + 3 biases
_W2, _B2 = 9, 15      # Linear(3, 2): 6 weights + 2 biases
_W3, _B3 = 17, 23     # Linear(2, 3): 6 weights + 3 biases


def relunet_kernel(w_ref, x_ref, o_ref):
    # w_ref: SMEM (32,) f32 packed params
    # x_ref: VMEM (2, TBL) f32   -- features in sublanes, batch in lanes
    # o_ref: VMEM (3, TBL) f32
    x0 = x_ref[0:1, :]                      # (1, TBL)
    x1 = x_ref[1:2, :]

    # ---- layer 1: Linear(2, 3) + ReLU ----
    h = [
        jnp.maximum(
            w_ref[_W1 + 2 * j] * x0 + w_ref[_W1 + 2 * j + 1] * x1 + w_ref[_B1 + j],
            0.0,
        )
        for j in range(3)
    ]

    # ---- layer 2: Linear(3, 2) + ReLU ----
    g = [
        jnp.maximum(
            w_ref[_W2 + 3 * j] * h[0]
            + w_ref[_W2 + 3 * j + 1] * h[1]
            + w_ref[_W2 + 3 * j + 2] * h[2]
            + w_ref[_B2 + j],
            0.0,
        )
        for j in range(2)
    ]

    # ---- layer 3: Linear(2, 3) ----
    for j in range(3):
        o_ref[j:j + 1, :] = (
            w_ref[_W3 + 2 * j] * g[0]
            + w_ref[_W3 + 2 * j + 1] * g[1]
            + w_ref[_B3 + j]
        )


def pack_params(params):
    """Pack (W, b) of all three layers into one (32,) f32 vector (called ONCE)."""
    parts = []
    for w, b in params:
        parts.append(jnp.asarray(w, jnp.float32).reshape(-1))
        parts.append(jnp.asarray(b, jnp.float32).reshape(-1))
    flat = jnp.concatenate(parts)           # 26 scalars
    return jnp.zeros((PARAM_LEN,), jnp.float32).at[:flat.shape[0]].set(flat)


def _relunet_forward_impl(x, w_packed):
    """x: [B, 2] float32, w_packed: (32,) from pack_params. Returns [B, 3]."""
    B = x.shape[0]
    # Lane tile: as large as reasonable so the per-grid-step overhead amortizes,
    # but never larger than the (128-rounded) batch itself.
    TBL = min(8192, ((B + LANE - 1) // LANE) * LANE)
    Bp = ((B + TBL - 1) // TBL) * TBL
    nb = Bp // TBL

    # Batch-in-lanes layout: x^T zero-padded to (2, Bp).
    x_t = jnp.zeros((2, Bp), jnp.float32).at[:, :B].set(x.astype(jnp.float32).T)

    out_t = pl.pallas_call(
        relunet_kernel,
        out_shape=jax.ShapeDtypeStruct((3, Bp), jnp.float32),
        grid=(nb,),
        in_specs=[
            pl.BlockSpec(memory_space=pltpu.MemorySpace.SMEM),   # packed params
            pl.BlockSpec((2, TBL), lambda i: (0, i)),            # batch-tiled x^T
        ],
        out_specs=pl.BlockSpec((3, TBL), lambda i: (0, i)),
        compiler_params=pltpu.CompilerParams(
            dimension_semantics=("parallel",),
        ),
        cost_estimate=pl.CostEstimate(
            flops=2 * Bp * (2 * 3 + 3 * 2 + 2 * 3),
            transcendentals=0,
            bytes_accessed=(2 + 3) * Bp * 4 + PARAM_LEN * 4,
        ),
    )(w_packed, x_t)

    return out_t[:, :B].T                   # [B, 3]


relunet_forward = jax.jit(_relunet_forward_impl)


def make_params():
    # Deterministic weights taken directly from the PyTorch module __init__.
    w1 = jnp.array([[1.0, 2.0], [3.0, 4.0], [5.0, 6.0]], jnp.float32)      # (3, 2)
    b1 = jnp.array([1.0, 2.0, 3.0], jnp.float32)                           # (3,)
    w2 = jnp.array([[1.0, 2.0, 3.0], [-4.0, -5.0, -6.0]], jnp.float32)     # (2, 3)
    b2 = jnp.array([2.0, 3.0], jnp.float32)                                # (2,)
    w3 = jnp.array([[1.0, 2.0], [-3.0, -4.0], [-5.0, -6.0]], jnp.float32)  # (3, 2)
    b3 = jnp.array([1.0, 2.0, 3.0], jnp.float32)                           # (3,)
    return ((w1, b1), (w2, b2), (w3, b3))


def reference_forward(x, params):
    (w1, b1), (w2, b2), (w3, b3) = params
    h = jnp.maximum(x @ w1.T + b1, 0.0)
    h = jnp.maximum(h @ w2.T + b2, 0.0)
    return h @ w3.T + b3


if __name__ == "__main__":
    key = jax.random.PRNGKey(0)
    params = make_params()
    w_packed = pack_params(params)          # packed ONCE, reused for every call

    # Primary check: the module's natural tiny shape (batch=2, in_features=2).
    x = jax.random.normal(key, (2, 2), dtype=jnp.float32)
    out = jax.block_until_ready(relunet_forward(x, w_packed))
    ref = reference_forward(x, params)
    assert out.shape == (2, 3), out.shape
    assert jnp.allclose(out, ref, atol=1e-5, rtol=1e-5), (out, ref)

    # Secondary check: a non-multiple-of-128 batch to exercise padding/tiling.
    x2 = jax.random.normal(jax.random.PRNGKey(1), (300, 2), dtype=jnp.float32)
    out2 = jax.block_until_ready(relunet_forward(x2, w_packed))
    ref2 = reference_forward(x2, params)
    assert out2.shape == (300, 3), out2.shape
    assert jnp.allclose(out2, ref2, atol=1e-4, rtol=1e-4)

    print("KERNEL_OK")
</pallas_src>

<mosaic_0001>
module attributes {stable_mosaic.version = 11 : i64} {
  func.func @relunet_kernel(%arg0: i32, %arg1: memref<32xf32, #tpu.memory_space<smem>>, %arg2: memref<2x128xf32, #tpu.memory_space<vmem>>, %arg3: memref<3x128xf32, #tpu.memory_space<vmem>>) attributes {dimension_semantics = [#tpu.dimension_semantics<parallel>], iteration_bounds = array<i64: 1>, scalar_prefetch = 0 : i64, scratch_operands = 0 : i64, tpu.core_type = #tpu.core_type<tc>, window_params = [{transform_indices = @transform_0, window_bounds = array<i64: 32>}, {transform_indices = @transform_1, window_bounds = array<i64: 2, 128>}, {transform_indices = @transform_2, window_bounds = array<i64: 3, 128>}]} {
    %c0 = arith.constant 0 : index
    %c0_0 = arith.constant 0 : index
    %0 = vector.load %arg2[%c0, %c0_0] : memref<2x128xf32, #tpu.memory_space<vmem>>, vector<1x128xf32>
    %c1 = arith.constant 1 : index
    %c0_1 = arith.constant 0 : index
    %1 = vector.load %arg2[%c1, %c0_1] : memref<2x128xf32, #tpu.memory_space<vmem>>, vector<1x128xf32>
    %c0_2 = arith.constant 0 : index
    %2 = memref.load %arg1[%c0_2] : memref<32xf32, #tpu.memory_space<smem>>
    %3 = vector.broadcast %2 : f32 to vector<1x128xf32>
    %4 = arith.mulf %3, %0 : vector<1x128xf32>
    %c1_3 = arith.constant 1 : index
    %5 = memref.load %arg1[%c1_3] : memref<32xf32, #tpu.memory_space<smem>>
    %6 = vector.broadcast %5 : f32 to vector<1x128xf32>
    %7 = arith.mulf %6, %1 : vector<1x128xf32>
    %8 = arith.addf %4, %7 : vector<1x128xf32>
    %c6 = arith.constant 6 : index
    %9 = memref.load %arg1[%c6] : memref<32xf32, #tpu.memory_space<smem>>
    %10 = vector.broadcast %9 : f32 to vector<1x128xf32>
    %11 = arith.addf %8, %10 : vector<1x128xf32>
    %cst = arith.constant 0.000000e+00 : f32
    %12 = vector.broadcast %cst : f32 to vector<1x128xf32>
    %13 = arith.maximumf %11, %12 : vector<1x128xf32>
    %c2 = arith.constant 2 : index
    %14 = memref.load %arg1[%c2] : memref<32xf32, #tpu.memory_space<smem>>
    %15 = vector.broadcast %14 : f32 to vector<1x128xf32>
    %16 = arith.mulf %15, %0 : vector<1x128xf32>
    %c3 = arith.constant 3 : index
    %17 = memref.load %arg1[%c3] : memref<32xf32, #tpu.memory_space<smem>>
    %18 = vector.broadcast %17 : f32 to vector<1x128xf32>
    %19 = arith.mulf %18, %1 : vector<1x128xf32>
    %20 = arith.addf %16, %19 : vector<1x128xf32>
    %c7 = arith.constant 7 : index
    %21 = memref.load %arg1[%c7] : memref<32xf32, #tpu.memory_space<smem>>
    %22 = vector.broadcast %21 : f32 to vector<1x128xf32>
    %23 = arith.addf %20, %22 : vector<1x128xf32>
    %cst_4 = arith.constant 0.000000e+00 : f32
    %24 = vector.broadcast %cst_4 : f32 to vector<1x128xf32>
    %25 = arith.maximumf %23, %24 : vector<1x128xf32>
    %c4 = arith.constant 4 : index
    %26 = memref.load %arg1[%c4] : memref<32xf32, #tpu.memory_space<smem>>
    %27 = vector.broadcast %26 : f32 to vector<1x128xf32>
    %28 = arith.mulf %27, %0 : vector<1x128xf32>
    %c5 = arith.constant 5 : index
    %29 = memref.load %arg1[%c5] : memref<32xf32, #tpu.memory_space<smem>>
    %30 = vector.broadcast %29 : f32 to vector<1x128xf32>
    %31 = arith.mulf %30, %1 : vector<1x128xf32>
    %32 = arith.addf %28, %31 : vector<1x128xf32>
    %c8 = arith.constant 8 : index
    %33 = memref.load %arg1[%c8] : memref<32xf32, #tpu.memory_space<smem>>
    %34 = vector.broadcast %33 : f32 to vector<1x128xf32>
    %35 = arith.addf %32, %34 : vector<1x128xf32>
    %cst_5 = arith.constant 0.000000e+00 : f32
    %36 = vector.broadcast %cst_5 : f32 to vector<1x128xf32>
    %37 = arith.maximumf %35, %36 : vector<1x128xf32>
    %c9 = arith.constant 9 : index
    %38 = memref.load %arg1[%c9] : memref<32xf32, #tpu.memory_space<smem>>
    %39 = vector.broadcast %38 : f32 to vector<1x128xf32>
    %40 = arith.mulf %39, %13 : vector<1x128xf32>
    %c10 = arith.constant 10 : index
    %41 = memref.load %arg1[%c10] : memref<32xf32, #tpu.memory_space<smem>>
    %42 = vector.broadcast %41 : f32 to vector<1x128xf32>
    %43 = arith.mulf %42, %25 : vector<1x128xf32>
    %44 = arith.addf %40, %43 : vector<1x128xf32>
    %c11 = arith.constant 11 : index
    %45 = memref.load %arg1[%c11] : memref<32xf32, #tpu.memory_space<smem>>
    %46 = vector.broadcast %45 : f32 to vector<1x128xf32>
    %47 = arith.mulf %46, %37 : vector<1x128xf32>
    %48 = arith.addf %44, %47 : vector<1x128xf32>
    %c15 = arith.constant 15 : index
    %49 = memref.load %arg1[%c15] : memref<32xf32, #tpu.memory_space<smem>>
    %50 = vector.broadcast %49 : f32 to vector<1x128xf32>
    %51 = arith.addf %48, %50 : vector<1x128xf32>
    %cst_6 = arith.constant 0.000000e+00 : f32
    %52 = vector.broadcast %cst_6 : f32 to vector<1x128xf32>
    %53 = arith.maximumf %51, %52 : vector<1x128xf32>
    %c12 = arith.constant 12 : index
    %54 = memref.load %arg1[%c12] : memref<32xf32, #tpu.memory_space<smem>>
    %55 = vector.broadcast %54 : f32 to vector<1x128xf32>
    %56 = arith.mulf %55, %13 : vector<1x128xf32>
    %c13 = arith.constant 13 : index
    %57 = memref.load %arg1[%c13] : memref<32xf32, #tpu.memory_space<smem>>
    %58 = vector.broadcast %57 : f32 to vector<1x128xf32>
    %59 = arith.mulf %58, %25 : vector<1x128xf32>
    %60 = arith.addf %56, %59 : vector<1x128xf32>
    %c14 = arith.constant 14 : index
    %61 = memref.load %arg1[%c14] : memref<32xf32, #tpu.memory_space<smem>>
    %62 = vector.broadcast %61 : f32 to vector<1x128xf32>
    %63 = arith.mulf %62, %37 : vector<1x128xf32>
    %64 = arith.addf %60, %63 : vector<1x128xf32>
    %c16 = arith.constant 16 : index
    %65 = memref.load %arg1[%c16] : memref<32xf32, #tpu.memory_space<smem>>
    %66 = vector.broadcast %65 : f32 to vector<1x128xf32>
    %67 = arith.addf %64, %66 : vector<1x128xf32>
    %cst_7 = arith.constant 0.000000e+00 : f32
    %68 = vector.broadcast %cst_7 : f32 to vector<1x128xf32>
    %69 = arith.maximumf %67, %68 : vector<1x128xf32>
    %c17 = arith.constant 17 : index
    %70 = memref.load %arg1[%c17] : memref<32xf32, #tpu.memory_space<smem>>
    %71 = vector.broadcast %70 : f32 to vector<1x128xf32>
    %72 = arith.mulf %71, %53 : vector<1x128xf32>
    %c18 = arith.constant 18 : index
    %73 = memref.load %arg1[%c18] : memref<32xf32, #tpu.memory_space<smem>>
    %74 = vector.broadcast %73 : f32 to vector<1x128xf32>
    %75 = arith.mulf %74, %69 : vector<1x128xf32>
    %76 = arith.addf %72, %75 : vector<1x128xf32>
    %c23 = arith.constant 23 : index
    %77 = memref.load %arg1[%c23] : memref<32xf32, #tpu.memory_space<smem>>
    %78 = vector.broadcast %77 : f32 to vector<1x128xf32>
    %79 = arith.addf %76, %78 : vector<1x128xf32>
    %c0_8 = arith.constant 0 : index
    %c0_9 = arith.constant 0 : index
    %80 = vector.load %arg3[%c0_8, %c0_9] : memref<3x128xf32, #tpu.memory_space<vmem>>, vector<1x128xf32>
    tpu.vector_store %arg3[%c0_8, %c0_9], %79 {strides = array<i32>} : memref<3x128xf32, #tpu.memory_space<vmem>>, vector<1x128xf32>,
    %c19 = arith.constant 19 : index
    %81 = memref.load %arg1[%c19] : memref<32xf32, #tpu.memory_space<smem>>
    %82 = vector.broadcast %81 : f32 to vector<1x128xf32>
    %83 = arith.mulf %82, %53 : vector<1x128xf32>
    %c20 = arith.constant 20 : index
    %84 = memref.load %arg1[%c20] : memref<32xf32, #tpu.memory_space<smem>>
    %85 = vector.broadcast %84 : f32 to vector<1x128xf32>
    %86 = arith.mulf %85, %69 : vector<1x128xf32>
    %87 = arith.addf %83, %86 : vector<1x128xf32>
    %c24 = arith.constant 24 : index
    %88 = memref.load %arg1[%c24] : memref<32xf32, #tpu.memory_space<smem>>
    %89 = vector.broadcast %88 : f32 to vector<1x128xf32>
    %90 = arith.addf %87, %89 : vector<1x128xf32>
    %c1_10 = arith.constant 1 : index
    %c0_11 = arith.constant 0 : index
    %91 = vector.load %arg3[%c1_10, %c0_11] : memref<3x128xf32, #tpu.memory_space<vmem>>, vector<1x128xf32>
    tpu.vector_store %arg3[%c1_10, %c0_11], %90 {strides = array<i32>} : memref<3x128xf32, #tpu.memory_space<vmem>>, vector<1x128xf32>,
    %c21 = arith.constant 21 : index
    %92 = memref.load %arg1[%c21] : memref<32xf32, #tpu.memory_space<smem>>
    %93 = vector.broadcast %92 : f32 to vector<1x128xf32>
    %94 = arith.mulf %93, %53 : vector<1x128xf32>
    %c22 = arith.constant 22 : index
    %95 = memref.load %arg1[%c22] : memref<32xf32, #tpu.memory_space<smem>>
    %96 = vector.broadcast %95 : f32 to vector<1x128xf32>
    %97 = arith.mulf %96, %69 : vector<1x128xf32>
    %98 = arith.addf %94, %97 : vector<1x128xf32>
    %c25 = arith.constant 25 : index
    %99 = memref.load %arg1[%c25] : memref<32xf32, #tpu.memory_space<smem>>
    %100 = vector.broadcast %99 : f32 to vector<1x128xf32>
    %101 = arith.addf %98, %100 : vector<1x128xf32>
    %c2_12 = arith.constant 2 : index
    %c0_13 = arith.constant 0 : index
    %102 = vector.load %arg3[%c2_12, %c0_13] : memref<3x128xf32, #tpu.memory_space<vmem>>, vector<1x128xf32>
    tpu.vector_store %arg3[%c2_12, %c0_13], %101 {strides = array<i32>} : memref<3x128xf32, #tpu.memory_space<vmem>>, vector<1x128xf32>,
    return
  }
  func.func @transform_0(%arg0: i32) -> i32 {
    %c0_i32 = arith.constant 0 : i32
    %c0_i32_0 = arith.constant 0 : i32
    return %c0_i32 : i32
  }
  func.func @transform_1(%arg0: i32) -> (i32, i32) {
    %c0_i32 = arith.constant 0 : i32
    %c0_i32_0 = arith.constant 0 : i32
    return %c0_i32, %arg0 : i32, i32
  }
  func.func @transform_2(%arg0: i32) -> (i32, i32) {
    %c0_i32 = arith.constant 0 : i32
    %c0_i32_0 = arith.constant 0 : i32
    return %c0_i32, %arg0 : i32, i32
  }
}

</mosaic_0001>

<llo_original>
// kernel: _relunet_forward_impl.1
$region0: #{_relunet_forward_impl.1}
  #allocation0 [shape = 'u32[]', space=smem, size = 0x4, offset = 0x4, fixed_abs, tag = 'smem constant byte address 0x4 - core index']
  #allocation1 [shape = 'u32[144,128]{1,0:T(1,128)}', space=vmem, size = 0x12000, scoped, tag = 'internal scratch']
  %s0 = inlined_call_operand.vmem [shape: f32[32], index: 0, kind: input, shape index: {}]
  %s1 = inlined_call_operand.vmem [shape: f32[2,128], index: 1, kind: input, shape index: {}]
  %s2 = inlined_call_operand.vmem [shape: f32[3,128], index: 2, kind: output, shape index: {}]
  %s3 = sld [smem:[#allocation0]]
  $region22: #{_relunet_forward_impl.1} parent=0
    _
  %s5 = ssub.s32 1, %s3
  %s6 = scalar_select 0, %s5, %s3
  $region1: #{_relunet_forward_impl.1} parent=0
    #allocation2 [shape = 'u8[512]{0}', space=smem, size = 0x200, scoped, tag = 'input window, operand 0, single buffered']
    #allocation3 [shape = 's32[1]{0}', space=sflag, size = 0x4, scoped, tag = 'scoped memory for _relunet_forward_impl.1']
    %7 = vsyncpa [#allocation3], 0
    // Predicated region
    $region2: #{_relunet_forward_impl.1} parent=1 // pred_check
      _
    $region3: #{_relunet_forward_impl.1} parent=1 // pred_check_branch
      %9 = sbr.rel (0) target = $region5
    $region4: #{_relunet_forward_impl.1} parent=1 // pred_region
      %s11 = ssub.s32 16, 16
      %12 = vsyncadd [#allocation3], %s11
      %s14 = sshll.u32 %s0, 4
      %s15 = int_to_ptr.vmem [resolvable:$true] %s14
      %17 = dma.vmem_to_smem %s15, 16, [#allocation2], [#allocation3]
    $region5: #{_relunet_forward_impl.1} parent=1 // pred_fallthru
      _
    // Predicated region
    $region6: #{_relunet_forward_impl.1} parent=1 // pred_check
      _
    $region7: #{_relunet_forward_impl.1} parent=1 // pred_check_branch
      %19 = sbr.rel (0) target = $region9
    $region8: #{_relunet_forward_impl.1} parent=1 // pred_region
      _
    $region9: #{_relunet_forward_impl.1} parent=1 // pred_fallthru
      _
    // Predicated region
    $region10: #{_relunet_forward_impl.1} parent=1 // pred_check
      _
    $region11: #{_relunet_forward_impl.1} parent=1 // pred_check_branch
      %21 = sbr.rel (0) target = $region13
    $region12: #{_relunet_forward_impl.1} parent=1 // pred_region
      %22 = dma.done [#allocation3], 16
    $region13: #{_relunet_forward_impl.1} parent=1 // pred_fallthru
      _
    %23 = sfence
    %v24 = vld [vmem:[%s1] sm:$0x1]
    %v25 = vld [vmem:[%s1 + $0x1] sm:$0x1]
    %s26 = sld [smem:[#allocation2]]
    %v27 = vstv %s26
    %v28 = vmul.f32 %v27, %v24
    %s29 = sld [smem:[#allocation2 + $0x1]]
    %v30 = vstv %s29
    %v31 = vmul.f32 %v30, %v25
    %v32 = vadd.f32 %v28, %v31
    %s33 = sld [smem:[#allocation2 + $0x6]]
    %v34 = vstv %s33
    %v35 = vadd.f32 %v32, %v34
    %v36 = vmax.f32 %v35, 0.0
    %s37 = sld [smem:[#allocation2 + $0x2]]
    %v38 = vstv %s37
    %v39 = vmul.f32 %v38, %v24
    %s40 = sld [smem:[#allocation2 + $0x3]]
    %v41 = vstv %s40
    %v42 = vmul.f32 %v41, %v25
    %v43 = vadd.f32 %v39, %v42
    %s44 = sld [smem:[#allocation2 + $0x7]]
    %v45 = vstv %s44
    %v46 = vadd.f32 %v43, %v45
    %v47 = vmax.f32 %v46, 0.0
    %s48 = sld [smem:[#allocation2 + $0x4]]
    %v49 = vstv %s48
    %v50 = vmul.f32 %v49, %v24
    %s51 = sld [smem:[#allocation2 + $0x5]]
    %v52 = vstv %s51
    %v53 = vmul.f32 %v52, %v25
    %v54 = vadd.f32 %v50, %v53
    %s55 = sld [smem:[#allocation2 + $0x8]]
    %v56 = vstv %s55
    %v57 = vadd.f32 %v54, %v56
    %v58 = vmax.f32 %v57, 0.0
    %s59 = sld [smem:[#allocation2 + $0x9]]
    %v60 = vstv %s59
    %v61 = vmul.f32 %v60, %v36
    %s62 = sld [smem:[#allocation2 + $0xa]]
    %v63 = vstv %s62
    %v64 = vmul.f32 %v63, %v47
    %v65 = vadd.f32 %v61, %v64
    %s66 = sld [smem:[#allocation2 + $0xb]]
    %v67 = vstv %s66
    %v68 = vmul.f32 %v67, %v58
    %v69 = vadd.f32 %v65, %v68
    %s70 = sld [smem:[#allocation2 + $0xf]]
    %v71 = vstv %s70
    %v72 = vadd.f32 %v69, %v71
    %v73 = vmax.f32 %v72, 0.0
    %s74 = sld [smem:[#allocation2 + $0xc]]
    %v75 = vstv %s74
    %v76 = vmul.f32 %v75, %v36
    %s77 = sld [smem:[#allocation2 + $0xd]]
    %v78 = vstv %s77
    %v79 = vmul.f32 %v78, %v47
    %v80 = vadd.f32 %v76, %v79
    %s81 = sld [smem:[#allocation2 + $0xe]]
    %v82 = vstv %s81
    %v83 = vmul.f32 %v82, %v58
    %v84 = vadd.f32 %v80, %v83
    %s85 = sld [smem:[#allocation2 + $0x10]]
    %v86 = vstv %s85
    %v87 = vadd.f32 %v84, %v86
    %v88 = vmax.f32 %v87, 0.0
    %s89 = sld [smem:[#allocation2 + $0x11]]
    %v90 = vstv %s89
    %v91 = vmul.f32 %v90, %v73
    %s92 = sld [smem:[#allocation2 + $0x12]]
    %v93 = vstv %s92
    %v94 = vmul.f32 %v93, %v88
    %v95 = vadd.f32 %v91, %v94
    %s96 = sld [smem:[#allocation2 + $0x17]]
    %v97 = vstv %s96
    %v98 = vadd.f32 %v95, %v97
    %99 = vst [vmem:[%s2] sm:$0x1] %v98
    %s100 = sld [smem:[#allocation2 + $0x13]]
    %v101 = vstv %s100
    %v102 = vmul.f32 %v101, %v73
    %s103 = sld [smem:[#allocation2 + $0x14]]
    %v104 = vstv %s103
    %v105 = vmul.f32 %v104, %v88
    %v106 = vadd.f32 %v102, %v105
    %s107 = sld [smem:[#allocation2 + $0x18]]
    %v108 = vstv %s107
    %v109 = vadd.f32 %v106, %v108
    %110 = vst [vmem:[%s2 + $0x1] sm:$0x1] %v109
    %s111 = sld [smem:[#allocation2 + $0x15]]
    %v112 = vstv %s111
    %v113 = vmul.f32 %v112, %v73
    %s114 = sld [smem:[#allocation2 + $0x16]]
    %v115 = vstv %s114
    %v116 = vmul.f32 %v115, %v88
    %v117 = vadd.f32 %v113, %v116
    %s118 = sld [smem:[#allocation2 + $0x19]]
    %v119 = vstv %s118
    %v120 = vadd.f32 %v117, %v119
    %121 = vst [vmem:[%s2 + $0x2] sm:$0x1] %v120
    // Predicated region
    $region14: #{_relunet_forward_impl.1} parent=1 // pred_check
      _
    $region15: #{_relunet_forward_impl.1} parent=1 // pred_check_branch
      %123 = sbr.rel (0) target = $region17
    $region16: #{_relunet_forward_impl.1} parent=1 // pred_region
      _
    $region17: #{_relunet_forward_impl.1} parent=1 // pred_fallthru
      _
    // Predicated region
    $region18: #{_relunet_forward_impl.1} parent=1 // pred_check
      _
    $region19: #{_relunet_forward_impl.1} parent=1 // pred_check_branch
      %125 = sbr.rel (0) target = $region21
    $region20: #{_relunet_forward_impl.1} parent=1 // pred_region
      _
    $region21: #{_relunet_forward_impl.1} parent=1 // pred_fallthru
      _
    %126 = vsyncpa [#allocation3], 1

</llo_original>
